<compile_context>
chip_gen: v5e
topology: v5e:2x2
jax: 0.10.0
libtpu: 0.0.40
codegen_flags: <defaults>
</compile_context>

<pallas_src>
import functools

import jax
import jax.numpy as jnp
from jax import lax
from jax.experimental import pallas as pl
from jax.experimental.pallas import tpu as pltpu


def _round_up(x, m):
    return (x + m - 1) // m * m


def _bidir_span_kernel(hw_ref, span_ref, o_ref, *, L):
    # hw_ref  : (L_ext, H) extended per-token projections (resident per batch):
    #           rows 0..L-1 = fwd@W_f, L..2L-1 = bwd@W_b, 2L = start_sentinel@W_f,
    #           2L+1 = end_sentinel@W_b, 2L+2 = bias, rest zero padding.
    # span_ref: (S_T, 2) int32 inclusive (start, end), tiled over S.
    # o_ref   : (S_T, H)
    l_ext = hw_ref.shape[0]
    sp = span_ref[...]
    starts = sp[:, 0:1].astype(jnp.int32)          # (S_T, 1) inclusive start
    ends = sp[:, 1:2].astype(jnp.int32)            # (S_T, 1) inclusive end
    ex_starts = starts - 1                         # exclusive fwd start; -1 -> start sentinel
    ex_ends = ends + 1                             # exclusive bwd start;  L -> end sentinel
    s_t = starts.shape[0]

    # Column indices of the five signed contributions in hW_ext.
    col_fwd_plus = ends                                               # +fwd[end]
    col_fwd_minus = jnp.where(ex_starts < 0, 2 * L, ex_starts)        # -fwd[start-1] / -start_sentinel
    col_bwd_plus = jnp.where(ex_ends >= L, 2 * L + 1, ex_ends + L)    # +bwd[end+1]  / +end_sentinel
    col_bwd_minus = starts + L                                        # -bwd[start]
    bias_col = 2 * L + 2                                              # +bias (every row)

    c = lax.broadcasted_iota(jnp.int32, (s_t, l_ext), 1)
    d = ((c == col_fwd_plus).astype(jnp.float32)
         - (c == col_fwd_minus).astype(jnp.float32)
         + (c == col_bwd_plus).astype(jnp.float32)
         - (c == col_bwd_minus).astype(jnp.float32)
         + (c == bias_col).astype(jnp.float32))
    d = d.astype(hw_ref.dtype)                     # exact 0/±1 in bf16

    proj = jnp.dot(d, hw_ref[...], preferred_element_type=jnp.float32)
    o_ref[...] = jnp.maximum(proj, 0.0).astype(o_ref.dtype)


def _choose_s_tile(S, desired=512):
    """Largest multiple of 8 that divides S and is <= desired (else full S)."""
    if desired >= S:
        return S
    t = (desired // 8) * 8
    while t >= 8:
        if S % t == 0:
            return t
        t -= 8
    return S


def bidir_forward(h, span_idx, params, *, s_tile=None,
                  compute_dtype=jnp.bfloat16, out_dtype=jnp.float32):
    B, L, D = h.shape
    S = span_idx.shape[1]
    half = D // 2
    w = params["w"]                     # (D, H)
    bias = params["b"]                  # (1, H)
    H = w.shape[1]

    if s_tile is None:
        s_tile = _choose_s_tile(S)
    assert S % s_tile == 0 and (s_tile == S or s_tile % 8 == 0)
    num_s_tiles = S // s_tile

    span = span_idx.astype(jnp.int32)   # (B, S, 2) — single input, one DMA per step

    # Fold the Linear through the per-token endpoint embeddings once per forward
    # (L-sized work; max_width x smaller than the per-span work in the kernel).
    prec = lax.Precision.HIGHEST if compute_dtype == jnp.float32 else lax.Precision.DEFAULT
    hwf = jnp.dot(h[..., :half], w[:half], precision=prec)              # (B, L, H)
    hwb = jnp.dot(h[..., half:], w[half:], precision=prec)              # (B, L, H)
    sswf = jnp.dot(params["start_sentinel"], w[:half], precision=prec)  # (1, H)
    eswb = jnp.dot(params["end_sentinel"], w[half:], precision=prec)    # (1, H)

    # Extended hW: sentinel corrections and bias ride along the single D @ hW_ext matmul.
    l_ext = _round_up(2 * L + 3, 8)
    extra = jnp.zeros((l_ext - 2 * L, H), jnp.float32)
    extra = extra.at[0].set(sswf[0]).at[1].set(eswb[0]).at[2].set(bias.reshape(-1))
    hw_ext = jnp.concatenate(
        [hwf, hwb, jnp.broadcast_to(extra[None], (B, l_ext - 2 * L, H))], axis=1
    ).astype(compute_dtype)                                             # (B, l_ext, H)

    # VMEM budget from actual block sizes (double-buffered), clamped so the same code
    # compiles on v5e/v6e (128 MiB VMEM) and v7x (64 MiB).
    # TODO(synk): add a third "parallel" grid axis over H (blocks of 128/256) when
    # 2 * l_ext * H * itemsize approaches the 64 MiB v7x limit.
    in_b = jnp.dtype(compute_dtype).itemsize
    out_b = jnp.dtype(out_dtype).itemsize
    need = (2 * l_ext * H * in_b            # hW_ext (double-buffered)
            + 2 * s_tile * 128 * 4          # span tile (lane-padded int32)
            + 2 * s_tile * H * out_b        # output tile (double-buffered)
            + 2 * s_tile * l_ext * 4)       # in-kernel D / compare intermediates
    vmem_limit = int(min(max(2 * need, 32 * 1024 * 1024), 64 * 1024 * 1024))

    kernel = functools.partial(_bidir_span_kernel, L=L)
    out = pl.pallas_call(
        kernel,
        out_shape=jax.ShapeDtypeStruct((B, S, H), out_dtype),
        grid_spec=pltpu.PrefetchScalarGridSpec(
            num_scalar_prefetch=0,
            grid=(B, num_s_tiles),
            in_specs=[
                pl.BlockSpec((None, l_ext, H), lambda b, s: (b, 0, 0)),    # hW_ext (resident per b)
                pl.BlockSpec((None, s_tile, 2), lambda b, s: (b, s, 0)),   # span (start,end) tile
            ],
            out_specs=pl.BlockSpec((None, s_tile, H), lambda b, s: (b, s, 0)),
        ),
        compiler_params=pltpu.CompilerParams(
            # B leads: v7x megacore splits batches, keeping the per-b-resident hW_ext
            # block local to one core instead of re-fetching it on both cores.
            dimension_semantics=("parallel", "parallel"),
            vmem_limit_bytes=vmem_limit,
        ),
    )(hw_ext, span)

    # H (Linear output dim) == hidden_size == D for this module; use H explicitly.
    return out.reshape(B, L, -1, H)


def bidir_reference(h, span_idx, params):
    # Pure-JAX reference mirroring AllenNLP BidirectionalEndpointSpanExtractor + Linear + ReLU.
    B, L, D = h.shape
    half = D // 2
    H = params["w"].shape[1]
    fwd, bwd = h[..., :half], h[..., half:]
    starts = span_idx[..., 0]
    ends = span_idx[..., 1]
    ex_starts = starts - 1
    start_mask = ex_starts == -1
    ex_ends = ends + 1
    end_mask = ex_ends >= L
    ex_starts = jnp.where(start_mask, 0, ex_starts)
    ex_ends = jnp.where(end_mask, 0, ex_ends)

    def gather(seq, idx):
        return jnp.take_along_axis(seq, idx[..., None], axis=1)

    fwd_start = gather(fwd, ex_starts)
    fwd_end = gather(fwd, ends)
    bwd_start = gather(bwd, ex_ends)
    bwd_end = gather(bwd, starts)
    fwd_start = jnp.where(start_mask[..., None], params["start_sentinel"][None], fwd_start)
    bwd_start = jnp.where(end_mask[..., None], params["end_sentinel"][None], bwd_start)
    span = jnp.concatenate([fwd_end - fwd_start, bwd_start - bwd_end], axis=-1)
    proj = jnp.maximum(
        jnp.dot(span, params["w"], precision=lax.Precision.HIGHEST) + params["b"], 0.0)
    return proj.reshape(B, L, -1, H)


if __name__ == "__main__":
    # Small but lane-dense shapes: H = D = 128 (multiple of 128 -> unmasked stores).
    B, L, D, max_width = 2, 16, 128, 8
    H = D
    S = L * max_width
    half = D // 2

    key = jax.random.PRNGKey(0)
    k1, k2, k3, k4, k5 = jax.random.split(key, 5)

    h = jax.random.normal(k1, (B, L, D), dtype=jnp.float32)

    # All spans [i, min(i + w, L - 1)] for i in range(L), w in range(max_width).
    span_starts = jnp.repeat(jnp.arange(L, dtype=jnp.int32), max_width)
    widths = jnp.tile(jnp.arange(max_width, dtype=jnp.int32), L)
    span_ends = jnp.minimum(span_starts + widths, L - 1)
    span_idx = jnp.broadcast_to(
        jnp.stack([span_starts, span_ends], axis=-1)[None], (B, S, 2)
    ).astype(jnp.int32)

    # Parameters (shapes from BidirectionalEndpointSpanExtractor + nn.Linear).
    params = {
        "start_sentinel": jax.random.normal(k2, (1, half), dtype=jnp.float32),
        "end_sentinel": jax.random.normal(k3, (1, half), dtype=jnp.float32),
        "w": jax.random.normal(k4, (D, H), dtype=jnp.float32) / jnp.sqrt(float(D)),
        "b": 0.01 * jax.random.normal(k5, (1, H), dtype=jnp.float32),
    }

    ref = bidir_reference(h, span_idx, params)

    # Exact-semantics path (f32 matmul), s_tile=64 -> grid=(B, 2) exercises S tiling.
    out_f32 = bidir_forward(h, span_idx, params, s_tile=64, compute_dtype=jnp.float32)
    jax.block_until_ready(out_f32)
    assert out_f32.shape == (B, L, max_width, H)
    err_f32 = float(jnp.max(jnp.abs(out_f32 - ref)))
    assert jnp.allclose(out_f32, ref, atol=1e-4, rtol=1e-4), err_f32

    # Fast path: bf16 D @ hW_ext with f32 accumulation (native MXU rate); tolerance is
    # the bf16-rounding envelope of the per-token projections.
    out_bf16 = bidir_forward(h, span_idx, params, s_tile=64, compute_dtype=jnp.bfloat16)
    jax.block_until_ready(out_bf16)
    assert out_bf16.shape == (B, L, max_width, H)
    err_bf16 = float(jnp.max(jnp.abs(out_bf16 - ref)))
    assert jnp.allclose(out_bf16, ref, atol=1e-1, rtol=1e-2), err_bf16

    print("KERNEL_OK")
</pallas_src>

<mosaic_0001>
module attributes {stable_mosaic.version = 11 : i64} {
  func.func @_bidir_span_kernel(%arg0: i32, %arg1: i32, %arg2: memref<1x40x128xf32, #tpu.memory_space<vmem>>, %arg3: memref<1x64x2xi32, #tpu.memory_space<vmem>>, %arg4: memref<1x64x128xf32, #tpu.memory_space<vmem>>) attributes {dimension_semantics = [#tpu.dimension_semantics<parallel>, #tpu.dimension_semantics<parallel>], iteration_bounds = array<i64: 2, 2>, scalar_prefetch = 0 : i64, scratch_operands = 0 : i64, tpu.core_type = #tpu.core_type<tc>, window_params = [{transform_indices = @transform_0, window_bounds = array<i64: 1, 40, 128>}, {transform_indices = @transform_1, window_bounds = array<i64: 1, 64, 2>}, {transform_indices = @transform_2, window_bounds = array<i64: 1, 64, 128>}]} {
    %c0 = arith.constant 0 : index
    %c0_0 = arith.constant 0 : index
    %c0_1 = arith.constant 0 : index
    %0 = vector.load %arg3[%c0, %c0_0, %c0_1] : memref<1x64x2xi32, #tpu.memory_space<vmem>>, vector<1x64x2xi32>
    %1 = vector.shape_cast %0 : vector<1x64x2xi32> to vector<64x2xi32>
    %2 = vector.extract_strided_slice %1 {offsets = [0, 0], sizes = [64, 1], strides = [1, 1]} : vector<64x2xi32> to vector<64x1xi32>
    %3 = vector.extract_strided_slice %1 {offsets = [0, 1], sizes = [64, 1], strides = [1, 1]} : vector<64x2xi32> to vector<64x1xi32>
    %c1_i32 = arith.constant 1 : i32
    %4 = vector.broadcast %c1_i32 : i32 to vector<64x1xi32>
    %5 = arith.subi %2, %4 : vector<64x1xi32>
    %c1_i32_2 = arith.constant 1 : i32
    %6 = vector.broadcast %c1_i32_2 : i32 to vector<64x1xi32>
    %7 = arith.addi %3, %6 : vector<64x1xi32>
    %c0_i32 = arith.constant 0 : i32
    %8 = vector.broadcast %c0_i32 : i32 to vector<64x1xi32>
    %9 = arith.cmpi slt, %5, %8 : vector<64x1xi32>
    %c32_i32 = arith.constant 32 : i32
    %10 = vector.broadcast %c32_i32 : i32 to vector<64x1xi32>
    %11 = arith.select %9, %10, %5 : vector<64x1xi1>, vector<64x1xi32>
    %c16_i32 = arith.constant 16 : i32
    %12 = vector.broadcast %c16_i32 : i32 to vector<64x1xi32>
    %13 = arith.cmpi sge, %7, %12 : vector<64x1xi32>
    %c16_i32_3 = arith.constant 16 : i32
    %14 = vector.broadcast %c16_i32_3 : i32 to vector<64x1xi32>
    %15 = arith.addi %7, %14 : vector<64x1xi32>
    %c33_i32 = arith.constant 33 : i32
    %16 = vector.broadcast %c33_i32 : i32 to vector<64x1xi32>
    %17 = arith.select %13, %16, %15 : vector<64x1xi1>, vector<64x1xi32>
    %c16_i32_4 = arith.constant 16 : i32
    %18 = vector.broadcast %c16_i32_4 : i32 to vector<64x1xi32>
    %19 = arith.addi %2, %18 : vector<64x1xi32>
    %20 = tpu.iota {dimensions = array<i32: 1>} : vector<64x40xi32>
    %21 = vector.broadcast %3 : vector<64x1xi32> to vector<64x40xi32>
    %22 = arith.cmpi eq, %20, %21 : vector<64x40xi32>
    %23 = arith.extui %22 : vector<64x40xi1> to vector<64x40xi32>
    %24 = arith.sitofp %23 : vector<64x40xi32> to vector<64x40xf32>
    %25 = vector.broadcast %11 : vector<64x1xi32> to vector<64x40xi32>
    %26 = arith.cmpi eq, %20, %25 : vector<64x40xi32>
    %27 = arith.extui %26 : vector<64x40xi1> to vector<64x40xi32>
    %28 = arith.sitofp %27 : vector<64x40xi32> to vector<64x40xf32>
    %29 = arith.subf %24, %28 : vector<64x40xf32>
    %30 = vector.broadcast %17 : vector<64x1xi32> to vector<64x40xi32>
    %31 = arith.cmpi eq, %20, %30 : vector<64x40xi32>
    %32 = arith.extui %31 : vector<64x40xi1> to vector<64x40xi32>
    %33 = arith.sitofp %32 : vector<64x40xi32> to vector<64x40xf32>
    %34 = arith.addf %29, %33 : vector<64x40xf32>
    %35 = vector.broadcast %19 : vector<64x1xi32> to vector<64x40xi32>
    %36 = arith.cmpi eq, %20, %35 : vector<64x40xi32>
    %37 = arith.extui %36 : vector<64x40xi1> to vector<64x40xi32>
    %38 = arith.sitofp %37 : vector<64x40xi32> to vector<64x40xf32>
    %39 = arith.subf %34, %38 : vector<64x40xf32>
    %c34_i32 = arith.constant 34 : i32
    %40 = vector.broadcast %c34_i32 : i32 to vector<64x40xi32>
    %41 = arith.cmpi eq, %20, %40 : vector<64x40xi32>
    %42 = arith.extui %41 : vector<64x40xi1> to vector<64x40xi32>
    %43 = arith.sitofp %42 : vector<64x40xi32> to vector<64x40xf32>
    %44 = arith.addf %39, %43 : vector<64x40xf32>
    %c0_5 = arith.constant 0 : index
    %c0_6 = arith.constant 0 : index
    %c0_7 = arith.constant 0 : index
    %45 = vector.load %arg2[%c0_5, %c0_6, %c0_7] : memref<1x40x128xf32, #tpu.memory_space<vmem>>, vector<1x40x128xf32>
    %46 = vector.shape_cast %45 : vector<1x40x128xf32> to vector<40x128xf32>
    %cst = arith.constant dense<0.000000e+00> : vector<64x128xf32>
    %47 = tpu.matmul %44, %46, %cst {dimension_numbers = #tpu.dot_dimension_numbers<[1], [0], [0], [1], [0, 0, 1, 1], [], []>} : vector<64x40xf32>, vector<40x128xf32>, vector<64x128xf32> -> vector<64x128xf32>
    %cst_8 = arith.constant 0.000000e+00 : f32
    %48 = vector.broadcast %cst_8 : f32 to vector<64x128xf32>
    %49 = arith.maximumf %47, %48 : vector<64x128xf32>
    %c0_9 = arith.constant 0 : index
    %c0_10 = arith.constant 0 : index
    %c0_11 = arith.constant 0 : index
    %50 = vector.load %arg4[%c0_9, %c0_10, %c0_11] : memref<1x64x128xf32, #tpu.memory_space<vmem>>, vector<1x64x128xf32>
    %51 = vector.shape_cast %50 : vector<1x64x128xf32> to vector<64x128xf32>
    %52 = vector.shape_cast %49 : vector<64x128xf32> to vector<1x64x128xf32>
    tpu.vector_store %arg4[%c0_9, %c0_10, %c0_11], %52 {strides = array<i32>} : memref<1x64x128xf32, #tpu.memory_space<vmem>>, vector<1x64x128xf32>,
    return
  }
  func.func @transform_0(%arg0: i32, %arg1: i32) -> (i32, i32, i32) {
    %c0_i32 = arith.constant 0 : i32
    %c0_i32_0 = arith.constant 0 : i32
    %c0_i32_1 = arith.constant 0 : i32
    return %arg0, %c0_i32, %c0_i32_0 : i32, i32, i32
  }
  func.func @transform_1(%arg0: i32, %arg1: i32) -> (i32, i32, i32) {
    %c0_i32 = arith.constant 0 : i32
    %c0_i32_0 = arith.constant 0 : i32
    return %arg0, %arg1, %c0_i32 : i32, i32, i32
  }
  func.func @transform_2(%arg0: i32, %arg1: i32) -> (i32, i32, i32) {
    %c0_i32 = arith.constant 0 : i32
    %c0_i32_0 = arith.constant 0 : i32
    return %arg0, %arg1, %c0_i32 : i32, i32, i32
  }
}

</mosaic_0001>

<llo_original>
// kernel: tpu_custom_call.1
$region0: #{tpu_custom_call.1}
  #allocation0 [shape = 'u32[]', space=smem, size = 0x4, offset = 0x4, fixed_abs, tag = 'smem constant byte address 0x4 - core index']
  #allocation1 [shape = 'u32[72,128]{1,0:T(1,128)}', space=vmem, size = 0x9000, scoped, tag = 'internal scratch']
  %s0 = inlined_call_operand.vmem [shape: f32[2,40,128], index: 0, kind: input, shape index: {}]
  %s1 = inlined_call_operand.vmem [shape: s32[2,128,2], index: 1, kind: input, shape index: {}]
  %s2 = inlined_call_operand.hbm [shape: f32[2,128,128], index: 2, kind: output, shape index: {}]
  %s3 = sld [smem:[#allocation0]]
  $region41: #{tpu_custom_call.1} parent=0
    _
  %s5 = ssub.s32 1, %s3
  %s6 = scalar_select 0, %s5, %s3
  $region1: #{tpu_custom_call.1} parent=0
    #allocation2 [shape = 'u8[65536]{0}', space=vmem, size = 0x10000, scoped, tag = 'output window, operand 0']
    #allocation3 [shape = 's32[2]{0}', space=sflag, size = 0x8, scoped, tag = 'scoped memory for tpu_custom_call.1']
    %7 = vsyncpa [#allocation3], 0
    %s8 = scalar_lea.sflag [#allocation3], 1
    %9 = vsyncpa %s8, 0
    loop: start=0, step=1, limit=6
    $region2: #{tpu_custom_call.1} parent=1 // loop_pre_header
      _
    $region3: #{tpu_custom_call.1} parent=1 // loop_header
      %s11 = sphi 0, %s15
      %p12 = scmp.ge.s32.totalorder %s11, 6
      %s18 = sphi 0, %s30
      %s19 = sphi 0, %s26
      %s20 = sphi 0, %s18
      %s21 = sphi 0, %s19
      %s22 = sphi 0, %s20
      %s23 = sphi 0, %s21
      %s33 = sphi 0, %s35
      %s36 = sphi 0, %s33
      %s37 = sphi 0, %s36
      %s53 = sphi 0, %s37
      %s61 = sphi 0, %s63
      %s64 = sphi 0, %s61
      %s65 = sphi 0, %s64
      %s81 = sphi 0, %s65
      %s89 = sphi 0, %s91
      %s92 = sphi 0, %s89
      %s93 = sphi 0, %s92
      %s109 = sphi 0, %s93
    $region4: #{tpu_custom_call.1} parent=1 // loop_header_branch
      %14 = sbr.rel (%p12) target = $region8
    $region5: #{tpu_custom_call.1} parent=1 // loop_body
      %s16 = ssub.s32 %s11, 1
      %s17 = ssub.s32 %s11, 2
      %s24 = sadd.s32 1, %s19
      %p25 = scmp.ge.s32.totalorder %s24, 2
      %s26 = scalar_select %p25, 0, %s24
      %s27 = sadd.s32 1, %s18
      %s28 = scalar_select %p25, %s27, %s18
      %p29 = scmp.ge.s32.totalorder %s28, 2
      %s30 = scalar_select %p29, 0, %s28
      %s31 = ssub.s32 %s18, %s30
      %p32 = scmp.eq.s32.totalorder %s31, 0
      %s34 = sadd.s32 %s33, 1
      %s35 = scalar_select %p32, %s33, %s34
      %p38 = pneg %p32
      %p39 = scmp.eq.s32.totalorder %s11, 3
      %p40 = por %p38, %p39
      %p41 = scmp.ne.s32.totalorder %s33, %s36
      %p42 = scmp.eq.s32.totalorder %s11, 0
      %p43 = por %p41, %p42
      %p44 = scmp.ne.s32.totalorder %s33, %s36
      %p45 = scmp.eq.s32.totalorder %s16, 3
      %p46 = por %p44, %p45
      %p47 = scmp.ne.s32.totalorder %s36, %s37
      %p48 = scmp.eq.s32.totalorder %s16, 0
      %p49 = por %p47, %p48
      %p50 = scmp.ne.s32.totalorder %s36, %s37
      %p51 = scmp.eq.s32.totalorder %s17, 3
      %p52 = por %p50, %p51
      %p54 = scmp.ne.s32.totalorder %s37, %s53
      %p55 = scmp.eq.s32.totalorder %s17, 0
      %p56 = por %p54, %p55
      %s57 = ssub.s32 %s18, %s30
      %s58 = ssub.s32 %s19, %s26
      %s59 = sor.u32 %s57, %s58
      %p60 = scmp.eq.s32.totalorder %s59, 0
      %s62 = sadd.s32 %s61, 1
      %s63 = scalar_select %p60, %s61, %s62
      %p66 = pneg %p60
      %p67 = scmp.eq.s32.totalorder %s11, 3
      %p68 = por %p66, %p67
      %p69 = scmp.ne.s32.totalorder %s61, %s64
      %p70 = scmp.eq.s32.totalorder %s11, 0
      %p71 = por %p69, %p70
      %p72 = scmp.ne.s32.totalorder %s61, %s64
      %p73 = scmp.eq.s32.totalorder %s16, 3
      %p74 = por %p72, %p73
      %p75 = scmp.ne.s32.totalorder %s64, %s65
      %p76 = scmp.eq.s32.totalorder %s16, 0
      %p77 = por %p75, %p76
      %p78 = scmp.ne.s32.totalorder %s64, %s65
      %p79 = scmp.eq.s32.totalorder %s17, 3
      %p80 = por %p78, %p79
      %p82 = scmp.ne.s32.totalorder %s65, %s81
      %p83 = scmp.eq.s32.totalorder %s17, 0
      %p84 = por %p82, %p83
      %s85 = ssub.s32 %s18, %s30
      %s86 = ssub.s32 %s19, %s26
      %s87 = sor.u32 %s85, %s86
      %p88 = scmp.eq.s32.totalorder %s87, 0
      %s90 = sadd.s32 %s89, 1
      %s91 = scalar_select %p88, %s89, %s90
      %p94 = pneg %p88
      %p95 = scmp.eq.s32.totalorder %s11, 3
      %p96 = por %p94, %p95
      %p97 = scmp.ne.s32.totalorder %s89, %s92
      %p98 = scmp.eq.s32.totalorder %s11, 0
      %p99 = por %p97, %p98
      %p100 = scmp.ne.s32.totalorder %s89, %s92
      %p101 = scmp.eq.s32.totalorder %s16, 3
      %p102 = por %p100, %p101
      %p103 = scmp.ne.s32.totalorder %s92, %s93
      %p104 = scmp.eq.s32.totalorder %s16, 0
      %p105 = por %p103, %p104
      %p106 = scmp.ne.s32.totalorder %s92, %s93
      %p107 = scmp.eq.s32.totalorder %s17, 3
      %p108 = por %p106, %p107
      %p110 = scmp.ne.s32.totalorder %s93, %s109
      %p111 = scmp.eq.s32.totalorder %s17, 0
      %p112 = por %p110, %p111
      %p113 = scmp.le.s32.totalorder 1, %s11
      %p114 = scmp.lt.s32.totalorder %s11, 5
      %p115 = pnand %p113, %p114
      %p116 = pneg %p115
      // Predicated region
      $region9: #{tpu_custom_call.1} parent=5 // pred_check
        _
      $region10: #{tpu_custom_call.1} parent=5 // pred_check_branch
        %118 = sbr.rel (%p115) target = $region12
      $region11: #{tpu_custom_call.1} parent=5 // pred_region
        %s119 = ssub.s32 %s11, 1
      $region12: #{tpu_custom_call.1} parent=5 // pred_fallthru
        _
      %p120 = scmp.lt.s32.totalorder %s11, 4
      // Predicated region
      $region13: #{tpu_custom_call.1} parent=5 // pred_check
        %p121 = pneg %p120
      $region14: #{tpu_custom_call.1} parent=5 // pred_check_branch
        %123 = sbr.rel (%p121) target = $region16
      $region15: #{tpu_custom_call.1} parent=5 // pred_region
        // Predicated region
        $region17: #{tpu_custom_call.1} parent=15 // pred_check
          %p124 = pneg %p43
        $region18: #{tpu_custom_call.1} parent=15 // pred_check_branch
          %126 = sbr.rel (%p124) target = $region20
        $region19: #{tpu_custom_call.1} parent=15 // pred_region
          %p127 = scmp.lt.s32.totalorder %s18, 1
          %s128 = scalar_select %p127, %s18, 1
          %s129 = smul.addr %s128, 5
          %s130 = smul.addr %s129, 8
          %s131 = scalar_lea.vmem %s0, %s130
        $region20: #{tpu_custom_call.1} parent=15 // pred_fallthru
          _
        // Predicated region
        $region21: #{tpu_custom_call.1} parent=15 // pred_check
          %p132 = pneg %p71
        $region22: #{tpu_custom_call.1} parent=15 // pred_check_branch
          %134 = sbr.rel (%p132) target = $region24
        $region23: #{tpu_custom_call.1} parent=15 // pred_region
          %s135 = smul.u32 8, %s19
          %p136 = scmp.lt.s32.totalorder %s18, 1
          %s137 = scalar_select %p136, %s18, 1
          %p138 = scmp.lt.s32.totalorder %s135, 15
          %s139 = scalar_select %p138, %s135, 15
          %s140 = smul.addr %s137, 16
          %s141 = sadd.s32 %s139, %s140
          %s142 = smul.addr %s141, 8
          %s143 = scalar_lea.vmem %s1, %s142
          %s144 = smul.u32 8, %s19
        $region24: #{tpu_custom_call.1} parent=15 // pred_fallthru
          _
      $region16: #{tpu_custom_call.1} parent=5 // pred_fallthru
        _
      %p145 = scmp.le.s32.totalorder 1, %s11
      %p146 = scmp.lt.s32.totalorder %s11, 5
      %p147 = pnand %p145, %p146
      %p148 = pneg %p147
      // Predicated region
      $region25: #{tpu_custom_call.1} parent=5 // pred_check
        _
      $region26: #{tpu_custom_call.1} parent=5 // pred_check_branch
        %150 = sbr.rel (%p147) target = $region28
      $region27: #{tpu_custom_call.1} parent=5 // pred_region
        %s151 = ssub.s32 %s11, 1
        %p152 = scmp.lt.s32.totalorder %s20, 1
        %s153 = scalar_select %p152, %s20, 1
        %s154 = smul.addr %s153, 5
        %s155 = smul.addr %s154, 8
        %s156 = scalar_lea.vmem %s0, %s155
        %p157 = pneg %p49
        %p158 = pneg %p46
        %s159 = smul.u32 8, %s21
        %p160 = scmp.lt.s32.totalorder %s20, 1
        %s161 = scalar_select %p160, %s20, 1
        %p162 = scmp.lt.s32.totalorder %s159, 15
        %s163 = scalar_select %p162, %s159, 15
        %s164 = smul.addr %s161, 16
        %s165 = sadd.s32 %s163, %s164
        %s166 = smul.addr %s165, 8
        %s167 = scalar_lea.vmem %s1, %s166
        %p168 = pneg %p77
        %p169 = pneg %p74
        %p170 = pneg %p105
        %p171 = pneg %p102
        %s172 = sand.u32 %s92, 1
        %s173 = scalar_lea.sflag [#allocation3], %s172
        %s174 = sand.u32 %s92, 1
        %s175 = smul.addr %s174, 64
        %s176 = scalar_lea.vmem [#allocation2], %s175
        %p177 = scmp.lt.s32.totalorder %s20, 1
        %s178 = scalar_select %p177, %s20, 1
        %s179 = smul.addr %s178, 5
        %s180 = smul.addr %s179, 8
        %s181 = scalar_lea.vmem %s0, %s180
        %s182 = smul.u32 8, %s21
        %p183 = scmp.lt.s32.totalorder %s20, 1
        %s184 = scalar_select %p183, %s20, 1
        %p185 = scmp.lt.s32.totalorder %s182, 15
        %s186 = scalar_select %p185, %s182, 15
        %s187 = smul.addr %s184, 16
        %s188 = sadd.s32 %s186, %s187
        %s189 = smul.addr %s188, 8
        %s190 = scalar_lea.vmem %s1, %s189
        %s191 = smul.u32 8, %s21
        %s192 = smul.u32 8, %s21
        %v193 = vld [vmem:[%s190] sm:$0xff]
        %v194 = vld [vmem:[%s190 + $0x8] sm:$0xff]
        %v195 = vld [vmem:[%s190 + $0x10] sm:$0xff]
        %v196 = vld [vmem:[%s190 + $0x18] sm:$0xff]
        %v197 = vld [vmem:[%s190 + $0x20] sm:$0xff]
        %v198 = vld [vmem:[%s190 + $0x28] sm:$0xff]
        %v199 = vld [vmem:[%s190 + $0x30] sm:$0xff]
        %v200 = vld [vmem:[%s190 + $0x38] sm:$0xff]
        %v201 = vsub.s32 %v193, 1
        %v202 = vsub.s32 %v194, 1
        %v203 = vsub.s32 %v195, 1
        %v204 = vsub.s32 %v196, 1
        %v205 = vsub.s32 %v197, 1
        %v206 = vsub.s32 %v198, 1
        %v207 = vsub.s32 %v199, 1
        %v208 = vsub.s32 %v200, 1
        %v209 = vadd.s32 %v193, 1
        %v210 = vadd.s32 %v194, 1
        %v211 = vadd.s32 %v195, 1
        %v212 = vadd.s32 %v196, 1
        %v213 = vadd.s32 %v197, 1
        %v214 = vadd.s32 %v198, 1
        %v215 = vadd.s32 %v199, 1
        %v216 = vadd.s32 %v200, 1
        %vm217 = vcmp.lt.s32.totalorder %v201, 0
        %vm218 = vcmp.lt.s32.totalorder %v202, 0
        %vm219 = vcmp.lt.s32.totalorder %v203, 0
        %vm220 = vcmp.lt.s32.totalorder %v204, 0
        %vm221 = vcmp.lt.s32.totalorder %v205, 0
        %vm222 = vcmp.lt.s32.totalorder %v206, 0
        %vm223 = vcmp.lt.s32.totalorder %v207, 0
        %vm224 = vcmp.lt.s32.totalorder %v208, 0
        %v225 = vsel %vm217, 32, %v201
        %v226 = vsel %vm218, 32, %v202
        %v227 = vsel %vm219, 32, %v203
        %v228 = vsel %vm220, 32, %v204
        %v229 = vsel %vm221, 32, %v205
        %v230 = vsel %vm222, 32, %v206
        %v231 = vsel %vm223, 32, %v207
        %v232 = vsel %vm224, 32, %v208
        %vm233 = vcmp.ge.s32.totalorder %v209, 16
        %vm234 = vcmp.ge.s32.totalorder %v210, 16
        %vm235 = vcmp.ge.s32.totalorder %v211, 16
        %vm236 = vcmp.ge.s32.totalorder %v212, 16
        %vm237 = vcmp.ge.s32.totalorder %v213, 16
        %vm238 = vcmp.ge.s32.totalorder %v214, 16
        %vm239 = vcmp.ge.s32.totalorder %v215, 16
        %vm240 = vcmp.ge.s32.totalorder %v216, 16
        %v241 = vadd.s32 %v209, 16
        %v242 = vadd.s32 %v210, 16
        %v243 = vadd.s32 %v211, 16
        %v244 = vadd.s32 %v212, 16
        %v245 = vadd.s32 %v213, 16
        %v246 = vadd.s32 %v214, 16
        %v247 = vadd.s32 %v215, 16
        %v248 = vadd.s32 %v216, 16
        %v249 = vsel %vm233, 33, %v241
        %v250 = vsel %vm234, 33, %v242
        %v251 = vsel %vm235, 33, %v243
        %v252 = vsel %vm236, 33, %v244
        %v253 = vsel %vm237, 33, %v245
        %v254 = vsel %vm238, 33, %v246
        %v255 = vsel %vm239, 33, %v247
        %v256 = vsel %vm240, 33, %v248
        %v257 = vadd.s32 %v193, 16
        %v258 = vadd.s32 %v194, 16
        %v259 = vadd.s32 %v195, 16
        %v260 = vadd.s32 %v196, 16
        %v261 = vadd.s32 %v197, 16
        %v262 = vadd.s32 %v198, 16
        %v263 = vadd.s32 %v199, 16
        %v264 = vadd.s32 %v200, 16
        %v265 = vlaneseq
        %v266 = vand.u32 %v265, 127
        %267 = vset.pattern.permute.xlu0 1
        %268 = vperm.xlu0 %267, %v193
        %v269 = vpop.permute.xlu0 %268
        %270 = vset.pattern.permute.xlu0 1
        %271 = vperm.xlu0 %270, %v194
        %v272 = vpop.permute.xlu0 %271
        %273 = vset.pattern.permute.xlu0 1
        %274 = vperm.xlu0 %273, %v195
        %v275 = vpop.permute.xlu0 %274
        %276 = vset.pattern.permute.xlu0 1
        %277 = vperm.xlu0 %276, %v196
        %v278 = vpop.permute.xlu0 %277
        %279 = vset.pattern.permute.xlu0 1
        %280 = vperm.xlu0 %279, %v197
        %v281 = vpop.permute.xlu0 %280
        %282 = vset.pattern.permute.xlu0 1
        %283 = vperm.xlu0 %282, %v198
        %v284 = vpop.permute.xlu0 %283
        %285 = vset.pattern.permute.xlu0 1
        %286 = vperm.xlu0 %285, %v199
        %v287 = vpop.permute.xlu0 %286
        %288 = vset.pattern.permute.xlu0 1
        %289 = vperm.xlu0 %288, %v200
        %v290 = vpop.permute.xlu0 %289
        %vm291 = vcmp.eq.s32.totalorder %v266, %v269
        %vm292 = vcmp.eq.s32.totalorder %v266, %v272
        %vm293 = vcmp.eq.s32.totalorder %v266, %v275
        %vm294 = vcmp.eq.s32.totalorder %v266, %v278
        %vm295 = vcmp.eq.s32.totalorder %v266, %v281
        %vm296 = vcmp.eq.s32.totalorder %v266, %v284
        %vm297 = vcmp.eq.s32.totalorder %v266, %v287
        %vm298 = vcmp.eq.s32.totalorder %v266, %v290
        %v299 = vsel %vm291, 1, 0
        %v300 = vsel %vm292, 1, 0
        %v301 = vsel %vm293, 1, 0
        %v302 = vsel %vm294, 1, 0
        %v303 = vsel %vm295, 1, 0
        %v304 = vsel %vm296, 1, 0
        %v305 = vsel %vm297, 1, 0
        %v306 = vsel %vm298, 1, 0
        %v307 = vcvt.s32.f32 %v299
        %v308 = vcvt.s32.f32 %v300
        %v309 = vcvt.s32.f32 %v301
        %v310 = vcvt.s32.f32 %v302
        %v311 = vcvt.s32.f32 %v303
        %v312 = vcvt.s32.f32 %v304
        %v313 = vcvt.s32.f32 %v305
        %v314 = vcvt.s32.f32 %v306
        %315 = vset.pattern.permute.xlu0 0
        %316 = vperm.xlu0 %315, %v225
        %v317 = vpop.permute.xlu0 %316
        %318 = vset.pattern.permute.xlu0 0
        %319 = vperm.xlu0 %318, %v226
        %v320 = vpop.permute.xlu0 %319
        %321 = vset.pattern.permute.xlu0 0
        %322 = vperm.xlu0 %321, %v227
        %v323 = vpop.permute.xlu0 %322
        %324 = vset.pattern.permute.xlu0 0
        %325 = vperm.xlu0 %324, %v228
        %v326 = vpop.permute.xlu0 %325
        %327 = vset.pattern.permute.xlu0 0
        %328 = vperm.xlu0 %327, %v229
        %v329 = vpop.permute.xlu0 %328
        %330 = vset.pattern.permute.xlu0 0
        %331 = vperm.xlu0 %330, %v230
        %v332 = vpop.permute.xlu0 %331
        %333 = vset.pattern.permute.xlu0 0
        %334 = vperm.xlu0 %333, %v231
        %v335 = vpop.permute.xlu0 %334
        %336 = vset.pattern.permute.xlu0 0
        %337 = vperm.xlu0 %336, %v232
        %v338 = vpop.permute.xlu0 %337
        %vm339 = vcmp.eq.s32.totalorder %v266, %v317
        %vm340 = vcmp.eq.s32.totalorder %v266, %v320
        %vm341 = vcmp.eq.s32.totalorder %v266, %v323
        %vm342 = vcmp.eq.s32.totalorder %v266, %v326
        %vm343 = vcmp.eq.s32.totalorder %v266, %v329
        %vm344 = vcmp.eq.s32.totalorder %v266, %v332
        %vm345 = vcmp.eq.s32.totalorder %v266, %v335
        %vm346 = vcmp.eq.s32.totalorder %v266, %v338
        %v347 = vsel %vm339, 1, 0
        %v348 = vsel %vm340, 1, 0
        %v349 = vsel %vm341, 1, 0
        %v350 = vsel %vm342, 1, 0
        %v351 = vsel %vm343, 1, 0
        %v352 = vsel %vm344, 1, 0
        %v353 = vsel %vm345, 1, 0
        %v354 = vsel %vm346, 1, 0
        %v355 = vcvt.s32.f32 %v347
        %v356 = vcvt.s32.f32 %v348
        %v357 = vcvt.s32.f32 %v349
        %v358 = vcvt.s32.f32 %v350
        %v359 = vcvt.s32.f32 %v351
        %v360 = vcvt.s32.f32 %v352
        %v361 = vcvt.s32.f32 %v353
        %v362 = vcvt.s32.f32 %v354
        %v363 = vsub.f32 %v307, %v355
        %v364 = vsub.f32 %v308, %v356
        %v365 = vsub.f32 %v309, %v357
        %v366 = vsub.f32 %v310, %v358
        %v367 = vsub.f32 %v311, %v359
        %v368 = vsub.f32 %v312, %v360
        %v369 = vsub.f32 %v313, %v361
        %v370 = vsub.f32 %v314, %v362
        %371 = vset.pattern.permute.xlu0 1
        %372 = vperm.xlu0 %371, %v249
        %v373 = vpop.permute.xlu0 %372
        %374 = vset.pattern.permute.xlu0 1
        %375 = vperm.xlu0 %374, %v250
        %v376 = vpop.permute.xlu0 %375
        %377 = vset.pattern.permute.xlu0 1
        %378 = vperm.xlu0 %377, %v251
        %v379 = vpop.permute.xlu0 %378
        %380 = vset.pattern.permute.xlu0 1
        %381 = vperm.xlu0 %380, %v252
        %v382 = vpop.permute.xlu0 %381
        %383 = vset.pattern.permute.xlu0 1
        %384 = vperm.xlu0 %383, %v253
        %v385 = vpop.permute.xlu0 %384
        %386 = vset.pattern.permute.xlu0 1
        %387 = vperm.xlu0 %386, %v254
        %v388 = vpop.permute.xlu0 %387
        %389 = vset.pattern.permute.xlu0 1
        %390 = vperm.xlu0 %389, %v255
        %v391 = vpop.permute.xlu0 %390
        %392 = vset.pattern.permute.xlu0 1
        %393 = vperm.xlu0 %392, %v256
        %v394 = vpop.permute.xlu0 %393
        %vm395 = vcmp.eq.s32.totalorder %v266, %v373
        %vm396 = vcmp.eq.s32.totalorder %v266, %v376
        %vm397 = vcmp.eq.s32.totalorder %v266, %v379
        %vm398 = vcmp.eq.s32.totalorder %v266, %v382
        %vm399 = vcmp.eq.s32.totalorder %v266, %v385
        %vm400 = vcmp.eq.s32.totalorder %v266, %v388
        %vm401 = vcmp.eq.s32.totalorder %v266, %v391
        %vm402 = vcmp.eq.s32.totalorder %v266, %v394
        %v403 = vsel %vm395, 1, 0
        %v404 = vsel %vm396, 1, 0
        %v405 = vsel %vm397, 1, 0
        %v406 = vsel %vm398, 1, 0
        %v407 = vsel %vm399, 1, 0
        %v408 = vsel %vm400, 1, 0
        %v409 = vsel %vm401, 1, 0
        %v410 = vsel %vm402, 1, 0
        %v411 = vcvt.s32.f32 %v403
        %v412 = vcvt.s32.f32 %v404
        %v413 = vcvt.s32.f32 %v405
        %v414 = vcvt.s32.f32 %v406
        %v415 = vcvt.s32.f32 %v407
        %v416 = vcvt.s32.f32 %v408
        %v417 = vcvt.s32.f32 %v409
        %v418 = vcvt.s32.f32 %v410
        %v419 = vadd.f32 %v363, %v411
        %v420 = vadd.f32 %v364, %v412
        %v421 = vadd.f32 %v365, %v413
        %v422 = vadd.f32 %v366, %v414
        %v423 = vadd.f32 %v367, %v415
        %v424 = vadd.f32 %v368, %v416
        %v425 = vadd.f32 %v369, %v417
        %v426 = vadd.f32 %v370, %v418
        %427 = vset.pattern.permute.xlu0 0
        %428 = vperm.xlu0 %427, %v257
        %v429 = vpop.permute.xlu0 %428
        %430 = vset.pattern.permute.xlu0 0
        %431 = vperm.xlu0 %430, %v258
        %v432 = vpop.permute.xlu0 %431
        %433 = vset.pattern.permute.xlu0 0
        %434 = vperm.xlu0 %433, %v259
        %v435 = vpop.permute.xlu0 %434
        %436 = vset.pattern.permute.xlu0 0
        %437 = vperm.xlu0 %436, %v260
        %v438 = vpop.permute.xlu0 %437
        %439 = vset.pattern.permute.xlu0 0
        %440 = vperm.xlu0 %439, %v261
        %v441 = vpop.permute.xlu0 %440
        %442 = vset.pattern.permute.xlu0 0
        %443 = vperm.xlu0 %442, %v262
        %v444 = vpop.permute.xlu0 %443
        %445 = vset.pattern.permute.xlu0 0
        %446 = vperm.xlu0 %445, %v263
        %v447 = vpop.permute.xlu0 %446
        %448 = vset.pattern.permute.xlu0 0
        %449 = vperm.xlu0 %448, %v264
        %v450 = vpop.permute.xlu0 %449
        %vm451 = vcmp.eq.s32.totalorder %v266, %v429
        %vm452 = vcmp.eq.s32.totalorder %v266, %v432
        %vm453 = vcmp.eq.s32.totalorder %v266, %v435
        %vm454 = vcmp.eq.s32.totalorder %v266, %v438
        %vm455 = vcmp.eq.s32.totalorder %v266, %v441
        %vm456 = vcmp.eq.s32.totalorder %v266, %v444
        %vm457 = vcmp.eq.s32.totalorder %v266, %v447
        %vm458 = vcmp.eq.s32.totalorder %v266, %v450
        %v459 = vsel %vm451, 1, 0
        %v460 = vsel %vm452, 1, 0
        %v461 = vsel %vm453, 1, 0
        %v462 = vsel %vm454, 1, 0
        %v463 = vsel %vm455, 1, 0
        %v464 = vsel %vm456, 1, 0
        %v465 = vsel %vm457, 1, 0
        %v466 = vsel %vm458, 1, 0
        %v467 = vcvt.s32.f32 %v459
        %v468 = vcvt.s32.f32 %v460
        %v469 = vcvt.s32.f32 %v461
        %v470 = vcvt.s32.f32 %v462
        %v471 = vcvt.s32.f32 %v463
        %v472 = vcvt.s32.f32 %v464
        %v473 = vcvt.s32.f32 %v465
        %v474 = vcvt.s32.f32 %v466
        %v475 = vsub.f32 %v419, %v467
        %v476 = vsub.f32 %v420, %v468
        %v477 = vsub.f32 %v421, %v469
        %v478 = vsub.f32 %v422, %v470
        %v479 = vsub.f32 %v423, %v471
        %v480 = vsub.f32 %v424, %v472
        %v481 = vsub.f32 %v425, %v473
        %v482 = vsub.f32 %v426, %v474
        %vm483 = vcmp.eq.s32.totalorder %v266, 34
        %v484 = vsel %vm483, 1, 0
        %v485 = vcvt.s32.f32 %v484
        %v486 = vadd.f32 %v475, %v485
        %v487 = vadd.f32 %v476, %v485
        %v488 = vadd.f32 %v477, %v485
        %v489 = vadd.f32 %v478, %v485
        %v490 = vadd.f32 %v479, %v485
        %v491 = vadd.f32 %v480, %v485
        %v492 = vadd.f32 %v481, %v485
        %v493 = vadd.f32 %v482, %v485
        %v494 = vld [vmem:[%s181] sm:$0xff]
        %v495 = vld [vmem:[%s181 + $0x8] sm:$0xff]
        %v496 = vld [vmem:[%s181 + $0x10] sm:$0xff]
        %v497 = vld [vmem:[%s181 + $0x18] sm:$0xff]
        %v498 = vld [vmem:[%s181 + $0x20] sm:$0xff]
        %vm499 = vcmask 326656
        %v501 = vsel %vm499, %v486, 0
        %v504 = vsel %vm499, %v487, 0
        %v507 = vsel %vm499, %v488, 0
        %v510 = vsel %vm499, %v489, 0
        %v513 = vsel %vm499, %v490, 0
        %v516 = vsel %vm499, %v491, 0
        %v519 = vsel %vm499, %v492, 0
        %v522 = vsel %vm499, %v493, 0
        %524 = vmatpush.msra.mxu0 0.0
        %525 = vmatpush.msra.mxu0 0.0
        %526 = vmatpush.msra.mxu0 0.0
        %527 = vmatpush.msra.mxu0 0.0
        %528 = vmatpush.msra.mxu0 0.0
        %529 = vmatpush.msra.mxu0 0.0
        %530 = vmatpush.msra.mxu0 0.0
        %531 = vmatpush.msra.mxu0 0.0
        %532 = vmatpush.msra.mxu0 0.0
        %533 = vmatpush.msra.mxu0 0.0
        %534 = vmatpush.msra.mxu0 0.0
        %535 = vmatpush.msra.mxu0 %v498
        %536 = vmatpush.msra.mxu0 %v497
        %537 = vmatpush.msra.mxu0 %v496
        %538 = vmatpush.msra.mxu0 %v495
        %539 = vmatpush.msra.mxu0 %v494
        %540 = vmatmul.f32.gmra.mxu0 %v501
        %v541 = vpop.f32.mrf.mxu0
        %v542 = vadd.f32 0.0, %v541
        %543 = vmatmul.f32.gmra.mxu0 %v504
        %v544 = vpop.f32.mrf.mxu0
        %v545 = vadd.f32 0.0, %v544
        %546 = vmatmul.f32.gmra.mxu0 %v507
        %v547 = vpop.f32.mrf.mxu0
        %v548 = vadd.f32 0.0, %v547
        %549 = vmatmul.f32.gmra.mxu0 %v510
        %v550 = vpop.f32.mrf.mxu0
        %v551 = vadd.f32 0.0, %v550
        %552 = vmatmul.f32.gmra.mxu0 %v513
        %v553 = vpop.f32.mrf.mxu0
        %v554 = vadd.f32 0.0, %v553
        %555 = vmatmul.f32.gmra.mxu0 %v516
        %v556 = vpop.f32.mrf.mxu0
        %v557 = vadd.f32 0.0, %v556
        %558 = vmatmul.f32.gmra.mxu0 %v519
        %v559 = vpop.f32.mrf.mxu0
        %v560 = vadd.f32 0.0, %v559
        %561 = vmatmul.f32.gmra.mxu0 %v522
        %v562 = vpop.f32.mrf.mxu0
        %v563 = vadd.f32 0.0, %v562
        %564 = vdwg.mxu0
        %v565 = vmax.f32 %v542, 0.0
        %v566 = vmax.f32 %v545, 0.0
        %v567 = vmax.f32 %v548, 0.0
        %v568 = vmax.f32 %v551, 0.0
        %v569 = vmax.f32 %v554, 0.0
        %v570 = vmax.f32 %v557, 0.0
        %v571 = vmax.f32 %v560, 0.0
        %v572 = vmax.f32 %v563, 0.0
        %573 = vst [vmem:[%s176] sm:$0xff] %v565
        %574 = vst [vmem:[%s176 + $0x8] sm:$0xff] %v566
        %575 = vst [vmem:[%s176 + $0x10] sm:$0xff] %v567
        %576 = vst [vmem:[%s176 + $0x18] sm:$0xff] %v568
        %577 = vst [vmem:[%s176 + $0x20] sm:$0xff] %v569
        %578 = vst [vmem:[%s176 + $0x28] sm:$0xff] %v570
        %579 = vst [vmem:[%s176 + $0x30] sm:$0xff] %v571
        %580 = vst [vmem:[%s176 + $0x38] sm:$0xff] %v572
        %s581 = sand.u32 %s92, 1
        %s582 = scalar_lea.sflag [#allocation3], %s581
        %s583 = sand.u32 %s92, 1
        %s584 = smul.addr %s583, 64
        %s585 = scalar_lea.vmem [#allocation2], %s584
        // Predicated region
        $region29: #{tpu_custom_call.1} parent=27 // pred_check
          %p586 = pneg %p102
        $region30: #{tpu_custom_call.1} parent=27 // pred_check_branch
          %588 = sbr.rel (%p586) target = $region32
        $region31: #{tpu_custom_call.1} parent=27 // pred_region
          %s589 = smul.u32 8, %s21
          %591 = vsyncadd %s582, 0
          %s592 = smul.addr %s20, 16
          %s593 = sadd.s32 %s589, %s592
          %s594 = smul.addr %s593, 8
          %s595 = scalar_lea.hbm %s2, %s594
          %s596 = sshll.u32 %s585, 4
          %s597 = int_to_ptr.vmem [resolvable:$true] %s596
          %s598 = sshll.u32 %s595, 4
          %s599 = int_to_ptr.hbm [resolvable:$true] %s598
          %604 = dma.vmem_to_hbm [thread:$0]  %s597, 1024, %s599, %s582, 128, 128, 8
        $region32: #{tpu_custom_call.1} parent=27 // pred_fallthru
          _
      $region28: #{tpu_custom_call.1} parent=5 // pred_fallthru
        _
      %p605 = scmp.le.s32.totalorder 2, %s11
      // Predicated region
      $region33: #{tpu_custom_call.1} parent=5 // pred_check
        %p606 = pneg %p605
      $region34: #{tpu_custom_call.1} parent=5 // pred_check_branch
        %608 = sbr.rel (%p606) target = $region36
      $region35: #{tpu_custom_call.1} parent=5 // pred_region
        %s609 = ssub.s32 %s11, 2
        // Predicated region
        $region37: #{tpu_custom_call.1} parent=35 // pred_check
          %p610 = pneg %p108
        $region38: #{tpu_custom_call.1} parent=35 // pred_check_branch
          %612 = sbr.rel (%p610) target = $region40
        $region39: #{tpu_custom_call.1} parent=35 // pred_region
          %s613 = sand.u32 %s93, 1
          %s614 = scalar_lea.sflag [#allocation3], %s613
          %s615 = sand.u32 %s93, 1
          %s616 = smul.addr %s615, 64
          %s617 = scalar_lea.vmem [#allocation2], %s616
          %619 = dma.done %s614, 1024
        $region40: #{tpu_custom_call.1} parent=35 // pred_fallthru
          _
      $region36: #{tpu_custom_call.1} parent=5 // pred_fallthru
        _
    $region6: #{tpu_custom_call.1} parent=1 // loop_footer
      %s15 = sadd.s32 1, %s11
    $region7: #{tpu_custom_call.1} parent=1 // loop_footer_branch
      %10 = sbr.rel target = $region3
    $region8: #{tpu_custom_call.1} parent=1 // loop_exit
      _
    %620 = vsyncpa [#allocation3], 1
    %s621 = scalar_lea.sflag [#allocation3], 1
    %622 = vsyncpa %s621, 1

</llo_original>
